<compile_context>
chip_gen: v7x
topology: tpu7x:2x2x1
jax: 0.10.0
libtpu: 0.0.40
codegen_flags: <defaults>
</compile_context>

<pallas_src>
import functools
import math

import jax
import jax.numpy as jnp
import numpy as np
from jax.experimental import pallas as pl
from jax.experimental.pallas import tpu as pltpu

_LOG_SQRT_2PI = 0.5 * math.log(2.0 * math.pi)
_LOG_2 = math.log(2.0)


# ---------------------------------------------------------------------------
# Kernels
# ---------------------------------------------------------------------------
def _train_kernel(x_ref, eps_ref, y_ref, logp_ref, *, n, upper_clamp):
    """is_training=True: y = tanh(mean + std*eps), logp summed over last dim."""
    xv = x_ref[...]                                            # (TB, 2n)
    mean = xv[:, :n]
    log_var = jnp.clip(xv[:, n:], -10.0, -upper_clamp)         # clamp(-10, -upper_clamp)
    std = jnp.exp(0.5 * log_var)                               # exp(log_var).sqrt()
    eps = eps_ref[...]
    z = mean + std * eps                                       # pre-tanh rsample

    # Share ONE exponential between tanh(z) and softplus(-2z) (EUP relief),
    # keeping the numerically stable softplus form of the tanh log-det:
    #   a = exp(-2|z|)
    #   tanh(z)        = sign(z) * (1 - a) / (1 + a)
    #   softplus(-2z)  = max(-2z, 0) + log1p(a)
    a = jnp.exp(-2.0 * jnp.abs(z))
    t = (1.0 - a) / (1.0 + a)
    y = jnp.where(z < 0.0, -t, t)

    # Normal(mean, std).log_prob(z); note (z - mean)/std == eps
    normal_lp = -0.5 * (eps * eps) - 0.5 * log_var - _LOG_SQRT_2PI
    # TanhTransform.log_abs_det_jacobian(z, y) = 2*(log2 - z - softplus(-2z))
    softplus_m2z = jnp.maximum(-2.0 * z, 0.0) + jnp.log1p(a)
    log_det = 2.0 * (_LOG_2 - z - softplus_m2z)
    lp = normal_lp - log_det

    y_ref[...] = y.astype(y_ref.dtype)
    logp_ref[...] = jnp.sum(lp, axis=-1, keepdims=True).astype(logp_ref.dtype)


def _eval_kernel(x_ref, eps_ref, y_ref, mean_sc, std_sc, acc_sc,
                 *, n, upper_clamp, inv_s):
    """is_training=False: y = mean over S tanh-squashed samples (S tiled on grid)."""
    s = pl.program_id(1)

    @pl.when(s == 0)
    def _():
        # Compute mean/std once per batch tile; the x tile is resident across
        # the whole s loop (block index unchanged => no re-DMA), but caching
        # here also hoists the lane-split + clip + exp out of the inner loop.
        xv = x_ref[...]                                        # (TB, 2n)
        mean_sc[...] = xv[:, :n]
        log_var = jnp.clip(xv[:, n:], -10.0, -upper_clamp)
        std_sc[...] = jnp.exp(0.5 * log_var)
        acc_sc[...] = jnp.zeros_like(acc_sc)

    # (S_chunk, TB, n) reparameterized samples; tanh on the EUP.
    z = mean_sc[...][None, :, :] + std_sc[...][None, :, :] * eps_ref[...]
    acc_sc[...] += jnp.sum(jnp.tanh(z), axis=0)

    @pl.when(s == pl.num_programs(1) - 1)
    def _():
        y_ref[...] = (acc_sc[...] * inv_s).astype(y_ref.dtype)


# ---------------------------------------------------------------------------
# Tiling helpers
# ---------------------------------------------------------------------------
def _pick_block_b(B, requested=None):
    """Largest multiple-of-8 divisor of B not exceeding the cap (else B)."""
    if B <= 8:
        return B
    cap = B if requested is None else min(B, requested)
    tb = (cap // 8) * 8
    while tb >= 8 and B % tb != 0:
        tb -= 8
    return tb if tb >= 8 else B


def _pick_s_chunk(S, cap=32):
    """Largest divisor of S not exceeding cap (keeps eps tile small & pipelined)."""
    for c in range(min(S, cap), 0, -1):
        if S % c == 0:
            return c
    return S


# ---------------------------------------------------------------------------
# Wrapper
# ---------------------------------------------------------------------------
def squashed_gaussian_head(x, eps, n, upper_clamp=-2.0, is_training=True,
                           block_b=None):
    """Pallas implementation of SquashedGaussianHead.forward.

    x:   (B, 2*n) float32 (passed unsplit; split happens in-kernel)
    eps: (B, n) standard-normal noise if is_training else (S, B, n)
    Returns (y, y_logprob) with y_logprob None in eval mode, matching PyTorch.
    """
    B = x.shape[0]
    assert x.shape[-1] == 2 * n
    # Default cap of 512 rows per tile: big tiles amortize the ~0.35us/step
    # grid overhead while keeping VMEM (double-buffered x + eps) bounded.
    tb = _pick_block_b(B, 512 if block_b is None else block_b)
    grid_b = B // tb

    if is_training:
        kern = functools.partial(_train_kernel, n=n, upper_clamp=upper_clamp)
        y, logp = pl.pallas_call(
            kern,
            grid=(grid_b,),
            in_specs=[
                pl.BlockSpec((tb, 2 * n), lambda i: (i, 0)),   # x, unsplit
                pl.BlockSpec((tb, n), lambda i: (i, 0)),       # eps
            ],
            out_specs=(
                pl.BlockSpec((tb, n), lambda i: (i, 0)),       # y
                pl.BlockSpec((tb, 1), lambda i: (i, 0)),       # logp
            ),
            out_shape=(
                jax.ShapeDtypeStruct((B, n), x.dtype),
                jax.ShapeDtypeStruct((B, 1), x.dtype),
            ),
            compiler_params=pltpu.CompilerParams(
                dimension_semantics=("parallel",),
            ),
        )(x, eps)
        return y, logp
    else:
        S = eps.shape[0]
        sc = _pick_s_chunk(S)
        grid_s = S // sc
        kern = functools.partial(
            _eval_kernel, n=n, upper_clamp=upper_clamp, inv_s=1.0 / S
        )
        y = pl.pallas_call(
            kern,
            grid=(grid_b, grid_s),                             # reduction axis last
            in_specs=[
                pl.BlockSpec((tb, 2 * n), lambda b, s: (b, 0)),     # x, unsplit
                pl.BlockSpec((sc, tb, n), lambda b, s: (s, b, 0)),  # eps chunk
            ],
            out_specs=pl.BlockSpec((tb, n), lambda b, s: (b, 0)),   # y (resident over s)
            out_shape=jax.ShapeDtypeStruct((B, n), x.dtype),
            scratch_shapes=[
                pltpu.VMEM((tb, n), jnp.float32),   # cached mean
                pltpu.VMEM((tb, n), jnp.float32),   # cached std
                pltpu.VMEM((tb, n), jnp.float32),   # tanh accumulator
            ],
            compiler_params=pltpu.CompilerParams(
                dimension_semantics=("parallel", "arbitrary"),
            ),
        )(x, eps)
        return y, None


# ---------------------------------------------------------------------------
# Pure-JAX references (mirror the PyTorch forward)
# ---------------------------------------------------------------------------
def _reference_train(x, eps, n, upper_clamp=-2.0):
    mean = x[..., :n]
    log_var = jnp.clip(x[..., n:], -10.0, -upper_clamp)
    std = jnp.exp(0.5 * log_var)
    z = mean + std * eps
    y = jnp.tanh(z)
    normal_lp = -0.5 * ((z - mean) / std) ** 2 - jnp.log(std) - _LOG_SQRT_2PI
    log_det = 2.0 * (_LOG_2 - z - jax.nn.softplus(-2.0 * z))
    logp = jnp.sum(normal_lp - log_det, axis=-1, keepdims=True)
    return y, logp


def _reference_eval(x, eps, n, upper_clamp=-2.0):
    mean = x[..., :n]
    log_var = jnp.clip(x[..., n:], -10.0, -upper_clamp)
    std = jnp.exp(0.5 * log_var)
    z = mean[None, :, :] + std[None, :, :] * eps
    return jnp.mean(jnp.tanh(z), axis=0)


if __name__ == "__main__":
    n = 64
    B = 32
    S = 100
    upper_clamp = -2.0

    key = jax.random.PRNGKey(0)
    kx, ke, kev = jax.random.split(key, 3)
    x = jax.random.normal(kx, (B, 2 * n), dtype=jnp.float32)
    eps_train = jax.random.normal(ke, (B, n), dtype=jnp.float32)
    eps_eval = jax.random.normal(kev, (S, B, n), dtype=jnp.float32)

    # Training path (block_b=8 -> 4 batch tiles, exercises the pipelined grid)
    y, logp = squashed_gaussian_head(
        x, eps_train, n, upper_clamp, is_training=True, block_b=8
    )
    y = jax.block_until_ready(y)
    logp = jax.block_until_ready(logp)

    # Eval path (y_logprob is None, matching the PyTorch module)
    y_eval, logp_eval = squashed_gaussian_head(
        x, eps_eval, n, upper_clamp, is_training=False, block_b=8
    )
    y_eval = jax.block_until_ready(y_eval)
    assert logp_eval is None

    # Also exercise the default (single-tile) batch tiling path.
    y_full, logp_full = squashed_gaussian_head(
        x, eps_train, n, upper_clamp, is_training=True
    )
    y_full = jax.block_until_ready(y_full)

    # Numerical checks against pure-JAX references of the same math.
    y_ref, logp_ref = _reference_train(x, eps_train, n, upper_clamp)
    np.testing.assert_allclose(np.asarray(y), np.asarray(y_ref), rtol=1e-5, atol=1e-5)
    np.testing.assert_allclose(np.asarray(logp), np.asarray(logp_ref), rtol=1e-4, atol=1e-4)
    np.testing.assert_allclose(np.asarray(y_full), np.asarray(y_ref), rtol=1e-5, atol=1e-5)
    np.testing.assert_allclose(np.asarray(logp_full), np.asarray(logp_ref), rtol=1e-4, atol=1e-4)

    y_eval_ref = _reference_eval(x, eps_eval, n, upper_clamp)
    np.testing.assert_allclose(
        np.asarray(y_eval), np.asarray(y_eval_ref), rtol=1e-5, atol=1e-5
    )

    assert y.shape == (B, n) and logp.shape == (B, 1) and y_eval.shape == (B, n)
    print("KERNEL_OK")
</pallas_src>

<mosaic_0001>
module attributes {stable_mosaic.version = 11 : i64} {
  func.func @_train_kernel(%arg0: i32, %arg1: memref<8x128xf32, #tpu.memory_space<vmem>>, %arg2: memref<8x64xf32, #tpu.memory_space<vmem>>, %arg3: memref<8x64xf32, #tpu.memory_space<vmem>>, %arg4: memref<8x1xf32, #tpu.memory_space<vmem>>) attributes {dimension_semantics = [#tpu.dimension_semantics<parallel>], iteration_bounds = array<i64: 4>, scalar_prefetch = 0 : i64, scratch_operands = 0 : i64, tpu.core_type = #tpu.core_type<tc>, window_params = [{transform_indices = @transform_0, window_bounds = array<i64: 8, 128>}, {transform_indices = @transform_1, window_bounds = array<i64: 8, 64>}, {transform_indices = @transform_2, window_bounds = array<i64: 8, 64>}, {transform_indices = @transform_3, window_bounds = array<i64: 8, 1>}]} {
    %c0 = arith.constant 0 : index
    %c0_0 = arith.constant 0 : index
    %0 = vector.load %arg1[%c0, %c0_0] : memref<8x128xf32, #tpu.memory_space<vmem>>, vector<8x128xf32>
    %1 = vector.extract_strided_slice %0 {offsets = [0, 0], sizes = [8, 64], strides = [1, 1]} : vector<8x128xf32> to vector<8x64xf32>
    %2 = vector.extract_strided_slice %0 {offsets = [0, 64], sizes = [8, 64], strides = [1, 1]} : vector<8x128xf32> to vector<8x64xf32>
    %cst = arith.constant -1.000000e+01 : f32
    %cst_1 = arith.constant 2.000000e+00 : f32
    %3 = vector.broadcast %cst : f32 to vector<8x64xf32>
    %4 = arith.maximumf %3, %2 : vector<8x64xf32>
    %5 = vector.broadcast %cst_1 : f32 to vector<8x64xf32>
    %6 = arith.minimumf %5, %4 : vector<8x64xf32>
    %cst_2 = arith.constant 5.000000e-01 : f32
    %7 = vector.broadcast %cst_2 : f32 to vector<8x64xf32>
    %8 = arith.mulf %7, %6 : vector<8x64xf32>
    %9 = math.exp %8 : vector<8x64xf32>
    %c0_3 = arith.constant 0 : index
    %c0_4 = arith.constant 0 : index
    %10 = vector.load %arg2[%c0_3, %c0_4] : memref<8x64xf32, #tpu.memory_space<vmem>>, vector<8x64xf32>
    %11 = arith.mulf %9, %10 : vector<8x64xf32>
    %12 = arith.addf %1, %11 : vector<8x64xf32>
    %13 = math.absf %12 : vector<8x64xf32>
    %cst_5 = arith.constant -2.000000e+00 : f32
    %14 = vector.broadcast %cst_5 : f32 to vector<8x64xf32>
    %15 = arith.mulf %14, %13 : vector<8x64xf32>
    %16 = math.exp %15 : vector<8x64xf32>
    %cst_6 = arith.constant 1.000000e+00 : f32
    %17 = vector.broadcast %cst_6 : f32 to vector<8x64xf32>
    %18 = arith.subf %17, %16 : vector<8x64xf32>
    %cst_7 = arith.constant 1.000000e+00 : f32
    %19 = vector.broadcast %cst_7 : f32 to vector<8x64xf32>
    %20 = arith.addf %19, %16 : vector<8x64xf32>
    %21 = arith.divf %18, %20 : vector<8x64xf32>
    %cst_8 = arith.constant 0.000000e+00 : f32
    %22 = vector.broadcast %cst_8 : f32 to vector<8x64xf32>
    %23 = arith.cmpf olt, %12, %22 : vector<8x64xf32>
    %cst_9 = arith.constant 0.000000e+00 : f32
    %24 = vector.broadcast %cst_9 : f32 to vector<8x64xf32>
    %25 = arith.subf %24, %21 : vector<8x64xf32>
    %26 = arith.select %23, %25, %21 : vector<8x64xi1>, vector<8x64xf32>
    %27 = arith.mulf %10, %10 : vector<8x64xf32>
    %cst_10 = arith.constant -5.000000e-01 : f32
    %28 = vector.broadcast %cst_10 : f32 to vector<8x64xf32>
    %29 = arith.mulf %28, %27 : vector<8x64xf32>
    %cst_11 = arith.constant 5.000000e-01 : f32
    %30 = vector.broadcast %cst_11 : f32 to vector<8x64xf32>
    %31 = arith.mulf %30, %6 : vector<8x64xf32>
    %32 = arith.subf %29, %31 : vector<8x64xf32>
    %cst_12 = arith.constant 0.918938517 : f32
    %33 = vector.broadcast %cst_12 : f32 to vector<8x64xf32>
    %34 = arith.subf %32, %33 : vector<8x64xf32>
    %cst_13 = arith.constant -2.000000e+00 : f32
    %35 = vector.broadcast %cst_13 : f32 to vector<8x64xf32>
    %36 = arith.mulf %35, %12 : vector<8x64xf32>
    %cst_14 = arith.constant 0.000000e+00 : f32
    %37 = vector.broadcast %cst_14 : f32 to vector<8x64xf32>
    %38 = arith.maximumf %36, %37 : vector<8x64xf32>
    %39 = math.log1p %16 : vector<8x64xf32>
    %40 = arith.addf %38, %39 : vector<8x64xf32>
    %cst_15 = arith.constant 0.693147182 : f32
    %41 = vector.broadcast %cst_15 : f32 to vector<8x64xf32>
    %42 = arith.subf %41, %12 : vector<8x64xf32>
    %43 = arith.subf %42, %40 : vector<8x64xf32>
    %cst_16 = arith.constant 2.000000e+00 : f32
    %44 = vector.broadcast %cst_16 : f32 to vector<8x64xf32>
    %45 = arith.mulf %44, %43 : vector<8x64xf32>
    %46 = arith.subf %34, %45 : vector<8x64xf32>
    %c0_17 = arith.constant 0 : index
    %c0_18 = arith.constant 0 : index
    %47 = vector.load %arg3[%c0_17, %c0_18] : memref<8x64xf32, #tpu.memory_space<vmem>>, vector<8x64xf32>
    tpu.vector_store %arg3[%c0_17, %c0_18], %26 {strides = array<i32>} : memref<8x64xf32, #tpu.memory_space<vmem>>, vector<8x64xf32>,
    %cst_19 = arith.constant dense<0.000000e+00> : vector<8xf32>
    %48 = vector.multi_reduction <add>, %46, %cst_19 [1] : vector<8x64xf32> to vector<8xf32>
    %49 = vector.shape_cast %48 : vector<8xf32> to vector<8x1xf32>
    %c0_20 = arith.constant 0 : index
    %c0_21 = arith.constant 0 : index
    %50 = vector.load %arg4[%c0_20, %c0_21] : memref<8x1xf32, #tpu.memory_space<vmem>>, vector<8x1xf32>
    tpu.vector_store %arg4[%c0_20, %c0_21], %49 {strides = array<i32>} : memref<8x1xf32, #tpu.memory_space<vmem>>, vector<8x1xf32>,
    return
  }
  func.func @transform_0(%arg0: i32) -> (i32, i32) {
    %c0_i32 = arith.constant 0 : i32
    %c0_i32_0 = arith.constant 0 : i32
    return %arg0, %c0_i32 : i32, i32
  }
  func.func @transform_1(%arg0: i32) -> (i32, i32) {
    %c0_i32 = arith.constant 0 : i32
    %c0_i32_0 = arith.constant 0 : i32
    return %arg0, %c0_i32 : i32, i32
  }
  func.func @transform_2(%arg0: i32) -> (i32, i32) {
    %c0_i32 = arith.constant 0 : i32
    %c0_i32_0 = arith.constant 0 : i32
    return %arg0, %c0_i32 : i32, i32
  }
  func.func @transform_3(%arg0: i32) -> (i32, i32) {
    %c0_i32 = arith.constant 0 : i32
    %c0_i32_0 = arith.constant 0 : i32
    return %arg0, %c0_i32 : i32, i32
  }
}

</mosaic_0001>

<llo_original>
// kernel: tpu_custom_call.1
$region0: #{tpu_custom_call.1}
  #allocation0 [shape = 'u32[]', space=smem, size = 0x4, offset = 0x4, fixed_abs, tag = 'smem constant byte address 0x4 - core index']
  #allocation1 [shape = 'u32[144,128]{1,0:T(1,128)}', space=vmem, size = 0x12000, scoped, tag = 'internal scratch']
  %s0 = inlined_call_operand.hbm [shape: f32[32,128], index: 0, kind: input, shape index: {}]
  %s1 = inlined_call_operand.hbm [shape: f32[32,64], index: 1, kind: input, shape index: {}]
  %s2 = inlined_call_operand.hbm [shape: f32[32,64], index: 2, kind: output, shape index: {0}]
  %s3 = inlined_call_operand.vmem [shape: f32[32,1], index: 3, kind: output, shape index: {1}]
  %4 = xla_tuple %s2, %s3
  %s5 = sld [smem:[#allocation0]]
  $region57: #{tpu_custom_call.1} parent=0
    _
  %s7 = ssub.s32 1, %s5
  %s8 = scalar_select 0, %s7, %s5
  $region1: #{tpu_custom_call.1} parent=0
    #allocation2 [shape = 'u8[8192]{0}', space=vmem, size = 0x2000, scoped, tag = 'input window, operand 0']
    #allocation3 [shape = 's32[2]{0}', space=sflag, size = 0x8, scoped, tag = 'scoped memory for tpu_custom_call.1']
    #allocation4 [shape = 's32[2]{0}', space=sflag, size = 0x8, scoped, tag = 'scoped memory for tpu_custom_call.1']
    #allocation5 [shape = 'u8[8192]{0}', space=vmem, size = 0x2000, scoped, tag = 'input window, operand 1']
    #allocation6 [shape = 's32[2]{0}', space=sflag, size = 0x8, scoped, tag = 'scoped memory for tpu_custom_call.1']
    #allocation7 [shape = 'u8[8192]{0}', space=vmem, size = 0x2000, scoped, tag = 'output window, operand 0']
    %9 = vsyncpa [#allocation3], 0
    %s10 = scalar_lea.sflag [#allocation3], 1
    %11 = vsyncpa %s10, 0
    %12 = vsyncpa [#allocation6], 0
    %s13 = scalar_lea.sflag [#allocation6], 1
    %14 = vsyncpa %s13, 0
    %15 = vsyncpa [#allocation4], 0
    %s16 = scalar_lea.sflag [#allocation4], 1
    %17 = vsyncpa %s16, 0
    loop: start=0, step=1, limit=6
    $region2: #{tpu_custom_call.1} parent=1 // loop_pre_header
      _
    $region3: #{tpu_custom_call.1} parent=1 // loop_header
      %s19 = sphi 0, %s23
      %p20 = scmp.ge.s32.totalorder %s19, 6
      %s29 = sphi 0, %s31
      %s32 = sphi 0, %s29
      %s33 = sphi 0, %s32
      %s49 = sphi 0, %s33
      %s55 = sphi 0, %s57
      %s58 = sphi 0, %s55
      %s59 = sphi 0, %s58
      %s75 = sphi 0, %s59
      %s81 = sphi 0, %s83
      %s84 = sphi 0, %s81
      %s85 = sphi 0, %s84
      %s101 = sphi 0, %s85
      %s107 = sphi 0, %s109
      %s110 = sphi 0, %s107
      %s111 = sphi 0, %s110
      %s127 = sphi 0, %s111
    $region4: #{tpu_custom_call.1} parent=1 // loop_header_branch
      %22 = sbr.rel (%p20) target = $region8
    $region5: #{tpu_custom_call.1} parent=1 // loop_body
      %s24 = ssub.s32 %s19, 1
      %s25 = ssub.s32 %s19, 2
      %s26 = sadd.s32 %s19, 1
      %s27 = ssub.s32 %s19, %s26
      %p28 = scmp.eq.s32.totalorder %s27, 0
      %s30 = sadd.s32 %s29, 1
      %s31 = scalar_select %p28, %s29, %s30
      %p34 = pneg %p28
      %p35 = scmp.eq.s32.totalorder %s19, 3
      %p36 = por %p34, %p35
      %p37 = scmp.ne.s32.totalorder %s29, %s32
      %p38 = scmp.eq.s32.totalorder %s19, 0
      %p39 = por %p37, %p38
      %p40 = scmp.ne.s32.totalorder %s29, %s32
      %p41 = scmp.eq.s32.totalorder %s24, 3
      %p42 = por %p40, %p41
      %p43 = scmp.ne.s32.totalorder %s32, %s33
      %p44 = scmp.eq.s32.totalorder %s24, 0
      %p45 = por %p43, %p44
      %p46 = scmp.ne.s32.totalorder %s32, %s33
      %p47 = scmp.eq.s32.totalorder %s25, 3
      %p48 = por %p46, %p47
      %p50 = scmp.ne.s32.totalorder %s33, %s49
      %p51 = scmp.eq.s32.totalorder %s25, 0
      %p52 = por %p50, %p51
      %s53 = ssub.s32 %s19, %s26
      %p54 = scmp.eq.s32.totalorder %s53, 0
      %s56 = sadd.s32 %s55, 1
      %s57 = scalar_select %p54, %s55, %s56
      %p60 = pneg %p54
      %p61 = scmp.eq.s32.totalorder %s19, 3
      %p62 = por %p60, %p61
      %p63 = scmp.ne.s32.totalorder %s55, %s58
      %p64 = scmp.eq.s32.totalorder %s19, 0
      %p65 = por %p63, %p64
      %p66 = scmp.ne.s32.totalorder %s55, %s58
      %p67 = scmp.eq.s32.totalorder %s24, 3
      %p68 = por %p66, %p67
      %p69 = scmp.ne.s32.totalorder %s58, %s59
      %p70 = scmp.eq.s32.totalorder %s24, 0
      %p71 = por %p69, %p70
      %p72 = scmp.ne.s32.totalorder %s58, %s59
      %p73 = scmp.eq.s32.totalorder %s25, 3
      %p74 = por %p72, %p73
      %p76 = scmp.ne.s32.totalorder %s59, %s75
      %p77 = scmp.eq.s32.totalorder %s25, 0
      %p78 = por %p76, %p77
      %s79 = ssub.s32 %s19, %s26
      %p80 = scmp.eq.s32.totalorder %s79, 0
      %s82 = sadd.s32 %s81, 1
      %s83 = scalar_select %p80, %s81, %s82
      %p86 = pneg %p80
      %p87 = scmp.eq.s32.totalorder %s19, 3
      %p88 = por %p86, %p87
      %p89 = scmp.ne.s32.totalorder %s81, %s84
      %p90 = scmp.eq.s32.totalorder %s19, 0
      %p91 = por %p89, %p90
      %p92 = scmp.ne.s32.totalorder %s81, %s84
      %p93 = scmp.eq.s32.totalorder %s24, 3
      %p94 = por %p92, %p93
      %p95 = scmp.ne.s32.totalorder %s84, %s85
      %p96 = scmp.eq.s32.totalorder %s24, 0
      %p97 = por %p95, %p96
      %p98 = scmp.ne.s32.totalorder %s84, %s85
      %p99 = scmp.eq.s32.totalorder %s25, 3
      %p100 = por %p98, %p99
      %p102 = scmp.ne.s32.totalorder %s85, %s101
      %p103 = scmp.eq.s32.totalorder %s25, 0
      %p104 = por %p102, %p103
      %s105 = ssub.s32 %s19, %s26
      %p106 = scmp.eq.s32.totalorder %s105, 0
      %s108 = sadd.s32 %s107, 1
      %s109 = scalar_select %p106, %s107, %s108
      %p112 = pneg %p106
      %p113 = scmp.eq.s32.totalorder %s19, 3
      %p114 = por %p112, %p113
      %p115 = scmp.ne.s32.totalorder %s107, %s110
      %p116 = scmp.eq.s32.totalorder %s19, 0
      %p117 = por %p115, %p116
      %p118 = scmp.ne.s32.totalorder %s107, %s110
      %p119 = scmp.eq.s32.totalorder %s24, 3
      %p120 = por %p118, %p119
      %p121 = scmp.ne.s32.totalorder %s110, %s111
      %p122 = scmp.eq.s32.totalorder %s24, 0
      %p123 = por %p121, %p122
      %p124 = scmp.ne.s32.totalorder %s110, %s111
      %p125 = scmp.eq.s32.totalorder %s25, 3
      %p126 = por %p124, %p125
      %p128 = scmp.ne.s32.totalorder %s111, %s127
      %p129 = scmp.eq.s32.totalorder %s25, 0
      %p130 = por %p128, %p129
      %p131 = scmp.le.s32.totalorder 1, %s19
      %p132 = scmp.lt.s32.totalorder %s19, 5
      %p133 = pnand %p131, %p132
      %p134 = pneg %p133
      // Predicated region
      $region9: #{tpu_custom_call.1} parent=5 // pred_check
        _
      $region10: #{tpu_custom_call.1} parent=5 // pred_check_branch
        %136 = sbr.rel (%p133) target = $region12
      $region11: #{tpu_custom_call.1} parent=5 // pred_region
        %s137 = ssub.s32 %s19, 1
      $region12: #{tpu_custom_call.1} parent=5 // pred_fallthru
        _
      %p138 = scmp.lt.s32.totalorder %s19, 4
      // Predicated region
      $region13: #{tpu_custom_call.1} parent=5 // pred_check
        %p139 = pneg %p138
      $region14: #{tpu_custom_call.1} parent=5 // pred_check_branch
        %141 = sbr.rel (%p139) target = $region16
      $region15: #{tpu_custom_call.1} parent=5 // pred_region
        // Predicated region
        $region17: #{tpu_custom_call.1} parent=15 // pred_check
          %p142 = pneg %p39
        $region18: #{tpu_custom_call.1} parent=15 // pred_check_branch
          %144 = sbr.rel (%p142) target = $region20
        $region19: #{tpu_custom_call.1} parent=15 // pred_region
          %s145 = sand.u32 %s29, 1
          %s146 = scalar_lea.sflag [#allocation3], %s145
          %s147 = sand.u32 %s29, 1
          %s148 = smul.addr %s147, 8
          %s149 = scalar_lea.vmem [#allocation2], %s148
          %s151 = ssub.s32 128, 128
          %152 = vsyncadd %s146, %s151
          %s153 = smul.addr %s19, 128
          %s154 = scalar_lea.hbm %s0, %s153
          %s156 = sshll.u32 %s149, 4
          %s157 = int_to_ptr.vmem [resolvable:$true] %s156
          %159 = dma.hbm_to_vmem [thread:$0]  %s154, 128, %s157, %s146
        $region20: #{tpu_custom_call.1} parent=15 // pred_fallthru
          _
        // Predicated region
        $region21: #{tpu_custom_call.1} parent=15 // pred_check
          %p160 = pneg %p65
        $region22: #{tpu_custom_call.1} parent=15 // pred_check_branch
          %162 = sbr.rel (%p160) target = $region24
        $region23: #{tpu_custom_call.1} parent=15 // pred_region
          %s163 = sand.u32 %s55, 1
          %s164 = scalar_lea.sflag [#allocation6], %s163
          %s165 = sand.u32 %s55, 1
          %s166 = smul.addr %s165, 8
          %s167 = scalar_lea.vmem [#allocation5], %s166
          %s169 = ssub.s32 128, 128
          %170 = vsyncadd %s164, %s169
          %s171 = smul.addr %s19, 128
          %s172 = scalar_lea.hbm %s1, %s171
          %s174 = sshll.u32 %s167, 4
          %s175 = int_to_ptr.vmem [resolvable:$true] %s174
          %177 = dma.hbm_to_vmem [thread:$0]  %s172, 128, %s175, %s164
        $region24: #{tpu_custom_call.1} parent=15 // pred_fallthru
          _
      $region16: #{tpu_custom_call.1} parent=5 // pred_fallthru
        _
      %p178 = scmp.le.s32.totalorder 1, %s19
      %p179 = scmp.lt.s32.totalorder %s19, 5
      %p180 = pnand %p178, %p179
      %p181 = pneg %p180
      // Predicated region
      $region25: #{tpu_custom_call.1} parent=5 // pred_check
        _
      $region26: #{tpu_custom_call.1} parent=5 // pred_check_branch
        %183 = sbr.rel (%p180) target = $region28
      $region27: #{tpu_custom_call.1} parent=5 // pred_region
        %s184 = ssub.s32 %s19, 1
        %s185 = sand.u32 %s32, 1
        %s186 = scalar_lea.sflag [#allocation3], %s185
        %s187 = sand.u32 %s32, 1
        %s188 = smul.addr %s187, 8
        %s189 = scalar_lea.vmem [#allocation2], %s188
        // Predicated region
        $region29: #{tpu_custom_call.1} parent=27 // pred_check
          %p190 = pneg %p45
        $region30: #{tpu_custom_call.1} parent=27 // pred_check_branch
          %192 = sbr.rel (%p190) target = $region32
        $region31: #{tpu_custom_call.1} parent=27 // pred_region
          %193 = dma.done %s186, 128
        $region32: #{tpu_custom_call.1} parent=27 // pred_fallthru
          _
        %s194 = sand.u32 %s58, 1
        %s195 = scalar_lea.sflag [#allocation6], %s194
        %s196 = sand.u32 %s58, 1
        %s197 = smul.addr %s196, 8
        %s198 = scalar_lea.vmem [#allocation5], %s197
        // Predicated region
        $region33: #{tpu_custom_call.1} parent=27 // pred_check
          %p199 = pneg %p71
        $region34: #{tpu_custom_call.1} parent=27 // pred_check_branch
          %201 = sbr.rel (%p199) target = $region36
        $region35: #{tpu_custom_call.1} parent=27 // pred_region
          %202 = dma.done %s195, 128
        $region36: #{tpu_custom_call.1} parent=27 // pred_fallthru
          _
        %s203 = sand.u32 %s32, 1
        %s204 = scalar_lea.sflag [#allocation3], %s203
        %s205 = sand.u32 %s32, 1
        %s206 = smul.addr %s205, 8
        %s207 = scalar_lea.vmem [#allocation2], %s206
        %p208 = pneg %p45
        %p209 = pneg %p42
        %s210 = sand.u32 %s58, 1
        %s211 = scalar_lea.sflag [#allocation6], %s210
        %s212 = sand.u32 %s58, 1
        %s213 = smul.addr %s212, 8
        %s214 = scalar_lea.vmem [#allocation5], %s213
        %p215 = pneg %p71
        %p216 = pneg %p68
        %p217 = pneg %p97
        %p218 = pneg %p94
        %s219 = sand.u32 %s84, 1
        %s220 = scalar_lea.sflag [#allocation4], %s219
        %s221 = sand.u32 %s84, 1
        %s222 = smul.addr %s221, 8
        %s223 = scalar_lea.vmem [#allocation7], %s222
        %p224 = pneg %p123
        %p225 = pneg %p120
        %p226 = scmp.lt.s32.totalorder %s24, 3
        %s227 = scalar_select %p226, %s24, 3
        %s228 = smul.addr %s227, 8
        %s229 = scalar_lea.vmem %s3, %s228
        %p230 = scmp.lt.s32.totalorder %s24, 3
        %s231 = scalar_select %p230, %s24, 3
        %s232 = smul.addr %s231, 8
        %s233 = scalar_lea.vmem %s3, %s232
        %v234 = vld [vmem:[%s189] sm:$0xff]
        %v235 = vmax.f32 %v234, -10.0
        %v236 = vmin.f32 %v235, 2.0
        %v237 = vmul.f32 %v236, 0.5
        %v238 = vmul.f32 %v237, 1.442695
        %v239 = vpow.pop %v238
        %v240 = vld [vmem:[%s198] sm:$0xff]
        %242 = vrot.lane.b32.xlu0 %v240, 64
        %v243 = vpop.permute.xlu0 %242
        %v245 = vmul.f32 %v239, %v243
        %247 = vrot.lane.b32.xlu0 %v245, 64
        %v248 = vpop.permute.xlu0 %247
        %v250 = vadd.f32 %v234, %v248
        %v251 = vand.u32 2147483647, %v250
        %v252 = vmul.f32 %v251, -2.0
        %v253 = vmul.f32 %v252, 1.442695
        %v254 = vpow.pop %v253
        %v255 = vsub.f32 1.0, %v254
        %v256 = vadd.f32 %v254, 1.0
        %v257 = vrcp.pop %v256
        %v258 = vmul.f32 %v255, %v257
        %vm259 = vcmp.lt.f32.partialorder %v250, 0.0
        %v260 = vsub.f32 0.0, %v258
        %v261 = vsel %vm259, %v260, %v258
        %v262 = vmul.f32 %v240, %v240
        %v263 = vmul.f32 %v262, -0.5
        %265 = vrot.lane.b32.xlu0 %v237, 64
        %v266 = vpop.permute.xlu0 %265
        %v268 = vsub.f32 %v263, %v266
        %v269 = vsub.f32 %v268, 0.9189385
        %v270 = vmul.f32 %v250, -2.0
        %v271 = vmax.f32 %v270, 0.0
        %v272 = vadd.f32 %v254, 1.0
        %v273 = vlog2.pop %v272
        %v274 = vmul.f32 %v273, 0.6931472
        %v275 = vmul.f32 -0.5, %v254
        %v276 = vadd.f32 %v275, 1.0
        %v277 = vmul.f32 %v276, %v254
        %v278 = vand.u32 2147483647, %v254
        %vm279 = vcmp.lt.f32.partialorder %v278, 0.0004427343
        %v280 = vsel %vm279, %v277, %v274
        %v281 = vadd.f32 %v271, %v280
        %v282 = vsub.f32 0.6931472, %v250
        %v283 = vsub.f32 %v282, %v281
        %v284 = vmul.f32 %v283, 2.0
        %v285 = vsub.f32 %v269, %v284
        %vm286 = vcmask 523264
        %287 = vst.msk [vmem:[%s223] sm:$0xff] %vm286, %v261
        %v288 = vsel %vm286, %v285, 0.0
        %289 = vadd.xlane.f32.xlu0 %v288
        %v290 = vpop.xlane.xlu0 %289
        %vm291 = vcmask 7168
        %292 = vst.msk [vmem:[%s233] sm:$0xff] %vm291, %v290
        %s293 = sand.u32 %s84, 1
        %s294 = scalar_lea.sflag [#allocation4], %s293
        %s295 = sand.u32 %s84, 1
        %s296 = smul.addr %s295, 8
        %s297 = scalar_lea.vmem [#allocation7], %s296
        %p298 = scmp.lt.s32.totalorder %s24, 3
        %s299 = scalar_select %p298, %s24, 3
        %s300 = smul.addr %s299, 8
        %s301 = scalar_lea.vmem %s3, %s300
        // Predicated region
        $region37: #{tpu_custom_call.1} parent=27 // pred_check
          %p302 = pneg %p94
        $region38: #{tpu_custom_call.1} parent=27 // pred_check_branch
          %304 = sbr.rel (%p302) target = $region40
        $region39: #{tpu_custom_call.1} parent=27 // pred_region
          %s306 = ssub.s32 128, 128
          %307 = vsyncadd %s294, %s306
          %s308 = smul.addr %s24, 128
          %s309 = scalar_lea.hbm %s2, %s308
          %s311 = sshll.u32 %s297, 4
          %s312 = int_to_ptr.vmem [resolvable:$true] %s311
          %314 = dma.vmem_to_hbm [thread:$0]  %s312, 128, %s309, %s294
        $region40: #{tpu_custom_call.1} parent=27 // pred_fallthru
          _
        // Predicated region
        $region41: #{tpu_custom_call.1} parent=27 // pred_check
          %p315 = pneg %p120
        $region42: #{tpu_custom_call.1} parent=27 // pred_check_branch
          %317 = sbr.rel (%p315) target = $region44
        $region43: #{tpu_custom_call.1} parent=27 // pred_region
          _
        $region44: #{tpu_custom_call.1} parent=27 // pred_fallthru
          _
      $region28: #{tpu_custom_call.1} parent=5 // pred_fallthru
        _
      %p318 = scmp.le.s32.totalorder 2, %s19
      // Predicated region
      $region45: #{tpu_custom_call.1} parent=5 // pred_check
        %p319 = pneg %p318
      $region46: #{tpu_custom_call.1} parent=5 // pred_check_branch
        %321 = sbr.rel (%p319) target = $region48
      $region47: #{tpu_custom_call.1} parent=5 // pred_region
        %s322 = ssub.s32 %s19, 2
        // Predicated region
        $region49: #{tpu_custom_call.1} parent=47 // pred_check
          %p323 = pneg %p100
        $region50: #{tpu_custom_call.1} parent=47 // pred_check_branch
          %325 = sbr.rel (%p323) target = $region52
        $region51: #{tpu_custom_call.1} parent=47 // pred_region
          %s326 = sand.u32 %s85, 1
          %s327 = scalar_lea.sflag [#allocation4], %s326
          %s328 = sand.u32 %s85, 1
          %s329 = smul.addr %s328, 8
          %s330 = scalar_lea.vmem [#allocation7], %s329
          %331 = dma.done %s327, 128
        $region52: #{tpu_custom_call.1} parent=47 // pred_fallthru
          _
        // Predicated region
        $region53: #{tpu_custom_call.1} parent=47 // pred_check
          %p332 = pneg %p126
        $region54: #{tpu_custom_call.1} parent=47 // pred_check_branch
          %334 = sbr.rel (%p332) target = $region56
        $region55: #{tpu_custom_call.1} parent=47 // pred_region
          %p335 = scmp.lt.s32.totalorder %s25, 3
          %s336 = scalar_select %p335, %s25, 3
          %s337 = smul.addr %s336, 8
          %s338 = scalar_lea.vmem %s3, %s337
        $region56: #{tpu_custom_call.1} parent=47 // pred_fallthru
          _
      $region48: #{tpu_custom_call.1} parent=5 // pred_fallthru
        _
    $region6: #{tpu_custom_call.1} parent=1 // loop_footer
      %s23 = sadd.s32 1, %s19
    $region7: #{tpu_custom_call.1} parent=1 // loop_footer_branch
      %18 = sbr.rel target = $region3
    $region8: #{tpu_custom_call.1} parent=1 // loop_exit
      _
    %339 = vsyncpa [#allocation3], 1
    %s340 = scalar_lea.sflag [#allocation3], 1
    %341 = vsyncpa %s340, 1
    %342 = vsyncpa [#allocation6], 1
    %s343 = scalar_lea.sflag [#allocation6], 1
    %344 = vsyncpa %s343, 1
    %345 = vsyncpa [#allocation4], 1
    %s346 = scalar_lea.sflag [#allocation4], 1
    %347 = vsyncpa %s346, 1

</llo_original>
